<compile_context>
chip_gen: v7x
topology: tpu7x:2x2x1
jax: 0.10.0
libtpu: 0.0.40
codegen_flags: <defaults>
</compile_context>

<pallas_src>
import functools

import numpy as np
import jax
import jax.numpy as jnp
from jax.experimental import pallas as pl
from jax.experimental.pallas import tpu as pltpu

BOS_ID = 0   # roberta <s>
PAD_ID = 1   # roberta <pad>
EOS_ID = 2   # roberta </s>

NUM_CLASSES = 4   # fluent / anomia / disfluency / agrammatism
L = 128           # max_length (small stand-in for roberta's 512)


def entail_encode_kernel(turn_lens_ref,   # SMEM prefetch: (B,) int32
                         turn_ref,        # VMEM (TB, L)   int32, BOS + turn @ 0..T
                         desc_ref,        # VMEM (NC, L)   int32, desc @ 0..d-1
                         eos_ref,         # VMEM (TB*NC,1) int32, eos position
                         ids_ref,         # out  (TB*NC,L) int32
                         mask_ref,        # out  (TB*NC,L) int32
                         content_sc,      # VMEM scratch (TB*NC, L) int32
                         *, chunk_rows):
    blk = pl.program_id(0)
    tb, seq_len = turn_ref.shape
    nc = desc_ref.shape[0]
    rows = tb * nc

    # Block-invariant pieces (hoisted).
    desc = desc_ref[...]                                               # (NC, L)
    pos_nc = jax.lax.broadcasted_iota(jnp.int32, (nc, seq_len), 1)     # (NC, L)

    # ---- Phase 1: per-turn data-dependent placement (scalar roll shift). ----
    # content row-group r: [BOS turn...] at pos<=t (turn row sublane-broadcast
    # by the where), rolled desc tokens at pos>t (garbage past eos is masked
    # in phase 2).
    def place_turn(r):
        t = turn_lens_ref[blk * tb + r]                                # scalar
        desc_p = pltpu.roll(desc, t + 1, 1)                            # (NC, L)
        turn_row = turn_ref[pl.ds(r, 1), :]                            # (1, L)
        content = jnp.where(pos_nc <= t, turn_row, desc_p)             # (NC, L)
        off = pl.multiple_of(r * nc, nc)
        content_sc[pl.ds(off, nc), :] = content

    if tb <= 8:
        for r in range(tb):                       # short static loop
            place_turn(r)
    else:
        def body(r, carry):
            place_turn(r)
            return carry
        jax.lax.fori_loop(0, tb, body, 0, unroll=4)

    # ---- Phase 2: vectorized pad/EOS/mask over dense (CH, L) chunks. ----
    pos = jax.lax.broadcasted_iota(jnp.int32, (chunk_rows, seq_len), 1)
    for c0 in range(0, rows, chunk_rows):          # static offsets
        eos = eos_ref[pl.ds(c0, chunk_rows), :]                        # (CH, 1)
        content = content_sc[pl.ds(c0, chunk_rows), :]                 # (CH, L)
        ids = jnp.where(pos < eos, content, jnp.int32(PAD_ID))
        ids = jnp.where(pos == eos, jnp.int32(EOS_ID), ids)
        ids_ref[pl.ds(c0, chunk_rows), :] = ids
        mask_ref[pl.ds(c0, chunk_rows), :] = (pos <= eos).astype(jnp.int32)


def _pick_tb(batch, max_tb=64):
    """Batch tile: prefer 8-row-dense output blocks and >=4 grid steps
    (2 steps per v7x TensorCore), then the largest such tile (amortizes the
    ~0.35us per-step pipeline overhead).  Per-block VMEM is KB-scale, so even
    TB=64 is far below any generation's VMEM limit."""
    cands = [tb for tb in range(1, min(batch, max_tb) + 1) if batch % tb == 0]

    def score(tb):
        nb = batch // tb
        rows = tb * NUM_CLASSES
        return (rows % 8 == 0, nb >= 4, nb >= 2, tb)

    return max(cands, key=score)


def _pick_chunk(rows, max_chunk=64):
    """Chunk of rows for the vectorized pass: largest divisor of `rows`
    <= 64 (bounds vreg pressure), preferring multiples of 8 (dense stores)."""
    cands = [c for c in range(1, min(rows, max_chunk) + 1) if rows % c == 0]
    return max(cands, key=lambda c: (c % 8 == 0, c))


def features_entail_forward(turn_tokens, turn_lens, desc_tokens, desc_lens):
    """turn_tokens: (B, T) int32, turn_lens: (B,) int32,
       desc_tokens: (NC, Dd) int32, desc_lens: (NC,) int32."""
    B, T = turn_tokens.shape
    NC, Dd = desc_tokens.shape
    assert NC == NUM_CLASSES and T + 2 + int(Dd) <= L

    TB = _pick_tb(B)
    nb = B // TB
    rows = TB * NC
    CH = _pick_chunk(rows)

    turn_tokens = turn_tokens.astype(jnp.int32)
    turn_lens = turn_lens.astype(jnp.int32)
    desc_lens = desc_lens.astype(jnp.int32)

    # Glue (plain JAX, tiny): explicit BOS at position 0, turn tokens at
    # positions 1..T, PAD filler to the lane-aligned L buffer (filler past the
    # actual turn length is never selected).  No per-class duplication.
    turn_placed = jnp.concatenate(
        [jnp.full((B, 1), BOS_ID, jnp.int32),
         turn_tokens,
         jnp.full((B, L - 1 - T), PAD_ID, jnp.int32)], axis=1)          # (B, L)
    desc_padded = jnp.pad(desc_tokens.astype(jnp.int32),
                          ((0, 0), (0, L - Dd)),
                          constant_values=PAD_ID)                       # (NC, L)
    # Per-(turn, class) EOS position = turn_len + desc_len + 1.
    eos_row = (turn_lens[:, None] + desc_lens[None, :] + 1
               ).reshape(B * NC, 1).astype(jnp.int32)                   # (B*NC,1)

    grid_spec = pltpu.PrefetchScalarGridSpec(
        num_scalar_prefetch=1,
        grid=(nb,),
        in_specs=[
            pl.BlockSpec((TB, L), lambda b, tl: (b, 0)),
            pl.BlockSpec((NC, L), lambda b, tl: (0, 0)),
            pl.BlockSpec((rows, 1), lambda b, tl: (b, 0)),
        ],
        out_specs=[
            pl.BlockSpec((rows, L), lambda b, tl: (b, 0)),
            pl.BlockSpec((rows, L), lambda b, tl: (b, 0)),
        ],
        scratch_shapes=[pltpu.VMEM((rows, L), jnp.int32)],
    )

    out_shape = (jax.ShapeDtypeStruct((B * NC, L), jnp.int32),
                 jax.ShapeDtypeStruct((B * NC, L), jnp.int32))

    # Memory-bound kernel: outputs dominate bytes; tell XLA so it can overlap.
    bytes_accessed = 4 * (2 * B * NC * L + B * L + NC * L + B * NC + B)
    cost = pl.CostEstimate(flops=10 * B * NC * L, transcendentals=0,
                           bytes_accessed=bytes_accessed)

    ids_flat, mask_flat = pl.pallas_call(
        functools.partial(entail_encode_kernel, chunk_rows=CH),
        out_shape=out_shape,
        grid_spec=grid_spec,
        compiler_params=pltpu.CompilerParams(
            dimension_semantics=("parallel",)),
        cost_estimate=cost,
    )(turn_lens, turn_placed, desc_padded, eos_row)

    return ids_flat.reshape(B, NC, L), mask_flat.reshape(B, NC, L)


def reference(turn_tokens, turn_lens, desc_tokens, desc_lens):
    turn_tokens = np.asarray(turn_tokens)
    desc_tokens = np.asarray(desc_tokens)
    B = turn_tokens.shape[0]
    ids = np.full((B, NUM_CLASSES, L), PAD_ID, np.int32)
    mask = np.zeros((B, NUM_CLASSES, L), np.int32)
    for b in range(B):
        t = int(turn_lens[b])
        for c in range(NUM_CLASSES):
            d = int(desc_lens[c])
            seq = [BOS_ID] + list(turn_tokens[b, :t]) + \
                  list(desc_tokens[c, :d]) + [EOS_ID]
            ids[b, c, :len(seq)] = np.asarray(seq, np.int32)
            mask[b, c, :len(seq)] = 1
    return ids, mask


if __name__ == "__main__":
    key = jax.random.PRNGKey(0)
    k1, k2, k3 = jax.random.split(key, 3)

    B, T = 32, 16
    # Synthetic pre-tokenized "turns" (roberta-base vocab ids).
    turn_tokens = jax.random.randint(k1, (B, T), 4, 50000, dtype=jnp.int32)
    turn_lens = jax.random.randint(k2, (B,), 5, T + 1, dtype=jnp.int32)

    # Synthetic pre-tokenized category descriptions (4 fixed phrases).
    Dd = 10
    desc_tokens = jax.random.randint(k3, (NUM_CLASSES, Dd), 4, 50000,
                                     dtype=jnp.int32)
    desc_lens = jnp.array([3, 9, 6, 7], dtype=jnp.int32)

    in_ids, in_mask = features_entail_forward(
        turn_tokens, turn_lens, desc_tokens, desc_lens)
    jax.block_until_ready((in_ids, in_mask))

    ref_ids, ref_mask = reference(turn_tokens, turn_lens, desc_tokens,
                                  desc_lens)
    np.testing.assert_array_equal(np.asarray(in_ids), ref_ids)
    np.testing.assert_array_equal(np.asarray(in_mask), ref_mask)

    assert in_ids.shape == (B, NUM_CLASSES, L)
    assert in_mask.shape == (B, NUM_CLASSES, L)
    print("KERNEL_OK")
</pallas_src>

<mosaic_0001>
module attributes {stable_mosaic.version = 11 : i64} {
  func.func @entail_encode_kernel(%arg0: i32, %arg1: memref<32xi32, #tpu.memory_space<smem>>, %arg2: memref<8x128xi32, #tpu.memory_space<vmem>>, %arg3: memref<4x128xi32, #tpu.memory_space<vmem>>, %arg4: memref<32x1xi32, #tpu.memory_space<vmem>>, %arg5: memref<32x128xi32, #tpu.memory_space<vmem>>, %arg6: memref<32x128xi32, #tpu.memory_space<vmem>>, %arg7: memref<32x128xi32, #tpu.memory_space<vmem>>) attributes {dimension_semantics = [#tpu.dimension_semantics<parallel>], iteration_bounds = array<i64: 4>, scalar_prefetch = 1 : i64, scratch_operands = 1 : i64, tpu.core_type = #tpu.core_type<tc>, window_params = [{transform_indices = @transform_0, window_bounds = array<i64: 8, 128>}, {pipeline_mode = #tpu.pipeline_mode<synchronous>, transform_indices = @transform_1, window_bounds = array<i64: 4, 128>}, {transform_indices = @transform_2, window_bounds = array<i64: 32, 1>}, {transform_indices = @transform_3, window_bounds = array<i64: 32, 128>}, {transform_indices = @transform_4, window_bounds = array<i64: 32, 128>}]} {
    %c0 = arith.constant 0 : index
    %c0_0 = arith.constant 0 : index
    %0 = vector.load %arg3[%c0, %c0_0] : memref<4x128xi32, #tpu.memory_space<vmem>>, vector<4x128xi32>
    %1 = tpu.iota {dimensions = array<i32: 1>} : vector<4x128xi32>
    %c8_i32 = arith.constant 8 : i32
    %2 = arith.muli %arg0, %c8_i32 : i32
    %c0_i32 = arith.constant 0 : i32
    %3 = arith.addi %2, %c0_i32 : i32
    %4 = arith.index_cast %3 : i32 to index
    %5 = memref.load %arg1[%4] : memref<32xi32, #tpu.memory_space<smem>>
    %c1_i32 = arith.constant 1 : i32
    %6 = arith.addi %5, %c1_i32 : i32
    %7 = tpu.dynamic_rotate %0 by %6 dim 1 : vector<4x128xi32>, i32 -> vector<4x128xi32>
    %c0_1 = arith.constant 0 : index
    %c0_2 = arith.constant 0 : index
    %8 = vector.load %arg2[%c0_1, %c0_2] : memref<8x128xi32, #tpu.memory_space<vmem>>, vector<1x128xi32>
    %9 = vector.broadcast %5 : i32 to vector<4x128xi32>
    %10 = arith.cmpi sle, %1, %9 : vector<4x128xi32>
    %11 = vector.shape_cast %8 : vector<1x128xi32> to vector<1x128xi32>
    %12 = vector.broadcast %11 : vector<1x128xi32> to vector<4x128xi32>
    %13 = arith.select %10, %12, %7 : vector<4x128xi1>, vector<4x128xi32>
    %c0_i32_3 = arith.constant 0 : i32
    %14 = tpu.assume_multiple %c0_i32_3, 4 : i32
    %15 = arith.index_cast %14 : i32 to index
    %c0_4 = arith.constant 0 : index
    %16 = vector.load %arg7[%15, %c0_4] : memref<32x128xi32, #tpu.memory_space<vmem>>, vector<4x128xi32>
    tpu.vector_store %arg7[%15, %c0_4], %13 {strides = array<i32>} : memref<32x128xi32, #tpu.memory_space<vmem>>, vector<4x128xi32>,
    %c8_i32_5 = arith.constant 8 : i32
    %17 = arith.muli %arg0, %c8_i32_5 : i32
    %c1_i32_6 = arith.constant 1 : i32
    %18 = arith.addi %17, %c1_i32_6 : i32
    %19 = arith.index_cast %18 : i32 to index
    %20 = memref.load %arg1[%19] : memref<32xi32, #tpu.memory_space<smem>>
    %c1_i32_7 = arith.constant 1 : i32
    %21 = arith.addi %20, %c1_i32_7 : i32
    %22 = tpu.dynamic_rotate %0 by %21 dim 1 : vector<4x128xi32>, i32 -> vector<4x128xi32>
    %c1 = arith.constant 1 : index
    %c0_8 = arith.constant 0 : index
    %23 = vector.load %arg2[%c1, %c0_8] : memref<8x128xi32, #tpu.memory_space<vmem>>, vector<1x128xi32>
    %24 = vector.broadcast %20 : i32 to vector<4x128xi32>
    %25 = arith.cmpi sle, %1, %24 : vector<4x128xi32>
    %26 = vector.shape_cast %23 : vector<1x128xi32> to vector<1x128xi32>
    %27 = vector.broadcast %26 : vector<1x128xi32> to vector<4x128xi32>
    %28 = arith.select %25, %27, %22 : vector<4x128xi1>, vector<4x128xi32>
    %c4_i32 = arith.constant 4 : i32
    %29 = tpu.assume_multiple %c4_i32, 4 : i32
    %30 = arith.index_cast %29 : i32 to index
    %c0_9 = arith.constant 0 : index
    %31 = vector.load %arg7[%30, %c0_9] : memref<32x128xi32, #tpu.memory_space<vmem>>, vector<4x128xi32>
    tpu.vector_store %arg7[%30, %c0_9], %28 {strides = array<i32>} : memref<32x128xi32, #tpu.memory_space<vmem>>, vector<4x128xi32>,
    %c8_i32_10 = arith.constant 8 : i32
    %32 = arith.muli %arg0, %c8_i32_10 : i32
    %c2_i32 = arith.constant 2 : i32
    %33 = arith.addi %32, %c2_i32 : i32
    %34 = arith.index_cast %33 : i32 to index
    %35 = memref.load %arg1[%34] : memref<32xi32, #tpu.memory_space<smem>>
    %c1_i32_11 = arith.constant 1 : i32
    %36 = arith.addi %35, %c1_i32_11 : i32
    %37 = tpu.dynamic_rotate %0 by %36 dim 1 : vector<4x128xi32>, i32 -> vector<4x128xi32>
    %c2 = arith.constant 2 : index
    %c0_12 = arith.constant 0 : index
    %38 = vector.load %arg2[%c2, %c0_12] : memref<8x128xi32, #tpu.memory_space<vmem>>, vector<1x128xi32>
    %39 = vector.broadcast %35 : i32 to vector<4x128xi32>
    %40 = arith.cmpi sle, %1, %39 : vector<4x128xi32>
    %41 = vector.shape_cast %38 : vector<1x128xi32> to vector<1x128xi32>
    %42 = vector.broadcast %41 : vector<1x128xi32> to vector<4x128xi32>
    %43 = arith.select %40, %42, %37 : vector<4x128xi1>, vector<4x128xi32>
    %c8_i32_13 = arith.constant 8 : i32
    %44 = tpu.assume_multiple %c8_i32_13, 4 : i32
    %45 = arith.index_cast %44 : i32 to index
    %c0_14 = arith.constant 0 : index
    %46 = vector.load %arg7[%45, %c0_14] : memref<32x128xi32, #tpu.memory_space<vmem>>, vector<4x128xi32>
    tpu.vector_store %arg7[%45, %c0_14], %43 {strides = array<i32>} : memref<32x128xi32, #tpu.memory_space<vmem>>, vector<4x128xi32>,
    %c8_i32_15 = arith.constant 8 : i32
    %47 = arith.muli %arg0, %c8_i32_15 : i32
    %c3_i32 = arith.constant 3 : i32
    %48 = arith.addi %47, %c3_i32 : i32
    %49 = arith.index_cast %48 : i32 to index
    %50 = memref.load %arg1[%49] : memref<32xi32, #tpu.memory_space<smem>>
    %c1_i32_16 = arith.constant 1 : i32
    %51 = arith.addi %50, %c1_i32_16 : i32
    %52 = tpu.dynamic_rotate %0 by %51 dim 1 : vector<4x128xi32>, i32 -> vector<4x128xi32>
    %c3 = arith.constant 3 : index
    %c0_17 = arith.constant 0 : index
    %53 = vector.load %arg2[%c3, %c0_17] : memref<8x128xi32, #tpu.memory_space<vmem>>, vector<1x128xi32>
    %54 = vector.broadcast %50 : i32 to vector<4x128xi32>
    %55 = arith.cmpi sle, %1, %54 : vector<4x128xi32>
    %56 = vector.shape_cast %53 : vector<1x128xi32> to vector<1x128xi32>
    %57 = vector.broadcast %56 : vector<1x128xi32> to vector<4x128xi32>
    %58 = arith.select %55, %57, %52 : vector<4x128xi1>, vector<4x128xi32>
    %c12_i32 = arith.constant 12 : i32
    %59 = tpu.assume_multiple %c12_i32, 4 : i32
    %60 = arith.index_cast %59 : i32 to index
    %c0_18 = arith.constant 0 : index
    %61 = vector.load %arg7[%60, %c0_18] : memref<32x128xi32, #tpu.memory_space<vmem>>, vector<4x128xi32>
    tpu.vector_store %arg7[%60, %c0_18], %58 {strides = array<i32>} : memref<32x128xi32, #tpu.memory_space<vmem>>, vector<4x128xi32>,
    %c8_i32_19 = arith.constant 8 : i32
    %62 = arith.muli %arg0, %c8_i32_19 : i32
    %c4_i32_20 = arith.constant 4 : i32
    %63 = arith.addi %62, %c4_i32_20 : i32
    %64 = arith.index_cast %63 : i32 to index
    %65 = memref.load %arg1[%64] : memref<32xi32, #tpu.memory_space<smem>>
    %c1_i32_21 = arith.constant 1 : i32
    %66 = arith.addi %65, %c1_i32_21 : i32
    %67 = tpu.dynamic_rotate %0 by %66 dim 1 : vector<4x128xi32>, i32 -> vector<4x128xi32>
    %c4 = arith.constant 4 : index
    %c0_22 = arith.constant 0 : index
    %68 = vector.load %arg2[%c4, %c0_22] : memref<8x128xi32, #tpu.memory_space<vmem>>, vector<1x128xi32>
    %69 = vector.broadcast %65 : i32 to vector<4x128xi32>
    %70 = arith.cmpi sle, %1, %69 : vector<4x128xi32>
    %71 = vector.shape_cast %68 : vector<1x128xi32> to vector<1x128xi32>
    %72 = vector.broadcast %71 : vector<1x128xi32> to vector<4x128xi32>
    %73 = arith.select %70, %72, %67 : vector<4x128xi1>, vector<4x128xi32>
    %c16_i32 = arith.constant 16 : i32
    %74 = tpu.assume_multiple %c16_i32, 4 : i32
    %75 = arith.index_cast %74 : i32 to index
    %c0_23 = arith.constant 0 : index
    %76 = vector.load %arg7[%75, %c0_23] : memref<32x128xi32, #tpu.memory_space<vmem>>, vector<4x128xi32>
    tpu.vector_store %arg7[%75, %c0_23], %73 {strides = array<i32>} : memref<32x128xi32, #tpu.memory_space<vmem>>, vector<4x128xi32>,
    %c8_i32_24 = arith.constant 8 : i32
    %77 = arith.muli %arg0, %c8_i32_24 : i32
    %c5_i32 = arith.constant 5 : i32
    %78 = arith.addi %77, %c5_i32 : i32
    %79 = arith.index_cast %78 : i32 to index
    %80 = memref.load %arg1[%79] : memref<32xi32, #tpu.memory_space<smem>>
    %c1_i32_25 = arith.constant 1 : i32
    %81 = arith.addi %80, %c1_i32_25 : i32
    %82 = tpu.dynamic_rotate %0 by %81 dim 1 : vector<4x128xi32>, i32 -> vector<4x128xi32>
    %c5 = arith.constant 5 : index
    %c0_26 = arith.constant 0 : index
    %83 = vector.load %arg2[%c5, %c0_26] : memref<8x128xi32, #tpu.memory_space<vmem>>, vector<1x128xi32>
    %84 = vector.broadcast %80 : i32 to vector<4x128xi32>
    %85 = arith.cmpi sle, %1, %84 : vector<4x128xi32>
    %86 = vector.shape_cast %83 : vector<1x128xi32> to vector<1x128xi32>
    %87 = vector.broadcast %86 : vector<1x128xi32> to vector<4x128xi32>
    %88 = arith.select %85, %87, %82 : vector<4x128xi1>, vector<4x128xi32>
    %c20_i32 = arith.constant 20 : i32
    %89 = tpu.assume_multiple %c20_i32, 4 : i32
    %90 = arith.index_cast %89 : i32 to index
    %c0_27 = arith.constant 0 : index
    %91 = vector.load %arg7[%90, %c0_27] : memref<32x128xi32, #tpu.memory_space<vmem>>, vector<4x128xi32>
    tpu.vector_store %arg7[%90, %c0_27], %88 {strides = array<i32>} : memref<32x128xi32, #tpu.memory_space<vmem>>, vector<4x128xi32>,
    %c8_i32_28 = arith.constant 8 : i32
    %92 = arith.muli %arg0, %c8_i32_28 : i32
    %c6_i32 = arith.constant 6 : i32
    %93 = arith.addi %92, %c6_i32 : i32
    %94 = arith.index_cast %93 : i32 to index
    %95 = memref.load %arg1[%94] : memref<32xi32, #tpu.memory_space<smem>>
    %c1_i32_29 = arith.constant 1 : i32
    %96 = arith.addi %95, %c1_i32_29 : i32
    %97 = tpu.dynamic_rotate %0 by %96 dim 1 : vector<4x128xi32>, i32 -> vector<4x128xi32>
    %c6 = arith.constant 6 : index
    %c0_30 = arith.constant 0 : index
    %98 = vector.load %arg2[%c6, %c0_30] : memref<8x128xi32, #tpu.memory_space<vmem>>, vector<1x128xi32>
    %99 = vector.broadcast %95 : i32 to vector<4x128xi32>
    %100 = arith.cmpi sle, %1, %99 : vector<4x128xi32>
    %101 = vector.shape_cast %98 : vector<1x128xi32> to vector<1x128xi32>
    %102 = vector.broadcast %101 : vector<1x128xi32> to vector<4x128xi32>
    %103 = arith.select %100, %102, %97 : vector<4x128xi1>, vector<4x128xi32>
    %c24_i32 = arith.constant 24 : i32
    %104 = tpu.assume_multiple %c24_i32, 4 : i32
    %105 = arith.index_cast %104 : i32 to index
    %c0_31 = arith.constant 0 : index
    %106 = vector.load %arg7[%105, %c0_31] : memref<32x128xi32, #tpu.memory_space<vmem>>, vector<4x128xi32>
    tpu.vector_store %arg7[%105, %c0_31], %103 {strides = array<i32>} : memref<32x128xi32, #tpu.memory_space<vmem>>, vector<4x128xi32>,
    %c8_i32_32 = arith.constant 8 : i32
    %107 = arith.muli %arg0, %c8_i32_32 : i32
    %c7_i32 = arith.constant 7 : i32
    %108 = arith.addi %107, %c7_i32 : i32
    %109 = arith.index_cast %108 : i32 to index
    %110 = memref.load %arg1[%109] : memref<32xi32, #tpu.memory_space<smem>>
    %c1_i32_33 = arith.constant 1 : i32
    %111 = arith.addi %110, %c1_i32_33 : i32
    %112 = tpu.dynamic_rotate %0 by %111 dim 1 : vector<4x128xi32>, i32 -> vector<4x128xi32>
    %c7 = arith.constant 7 : index
    %c0_34 = arith.constant 0 : index
    %113 = vector.load %arg2[%c7, %c0_34] : memref<8x128xi32, #tpu.memory_space<vmem>>, vector<1x128xi32>
    %114 = vector.broadcast %110 : i32 to vector<4x128xi32>
    %115 = arith.cmpi sle, %1, %114 : vector<4x128xi32>
    %116 = vector.shape_cast %113 : vector<1x128xi32> to vector<1x128xi32>
    %117 = vector.broadcast %116 : vector<1x128xi32> to vector<4x128xi32>
    %118 = arith.select %115, %117, %112 : vector<4x128xi1>, vector<4x128xi32>
    %c28_i32 = arith.constant 28 : i32
    %119 = tpu.assume_multiple %c28_i32, 4 : i32
    %120 = arith.index_cast %119 : i32 to index
    %c0_35 = arith.constant 0 : index
    %121 = vector.load %arg7[%120, %c0_35] : memref<32x128xi32, #tpu.memory_space<vmem>>, vector<4x128xi32>
    tpu.vector_store %arg7[%120, %c0_35], %118 {strides = array<i32>} : memref<32x128xi32, #tpu.memory_space<vmem>>, vector<4x128xi32>,
    %122 = tpu.iota {dimensions = array<i32: 1>} : vector<32x128xi32>
    %c0_36 = arith.constant 0 : index
    %c0_37 = arith.constant 0 : index
    %123 = vector.load %arg4[%c0_36, %c0_37] : memref<32x1xi32, #tpu.memory_space<vmem>>, vector<32x1xi32>
    %c0_38 = arith.constant 0 : index
    %c0_39 = arith.constant 0 : index
    %124 = vector.load %arg7[%c0_38, %c0_39] : memref<32x128xi32, #tpu.memory_space<vmem>>, vector<32x128xi32>
    %125 = vector.broadcast %123 : vector<32x1xi32> to vector<32x128xi32>
    %126 = arith.cmpi slt, %122, %125 : vector<32x128xi32>
    %c1_i32_40 = arith.constant 1 : i32
    %127 = vector.broadcast %c1_i32_40 : i32 to vector<32x128xi32>
    %128 = arith.select %126, %124, %127 : vector<32x128xi1>, vector<32x128xi32>
    %129 = vector.broadcast %123 : vector<32x1xi32> to vector<32x128xi32>
    %130 = arith.cmpi eq, %122, %129 : vector<32x128xi32>
    %c2_i32_41 = arith.constant 2 : i32
    %131 = vector.broadcast %c2_i32_41 : i32 to vector<32x128xi32>
    %132 = arith.select %130, %131, %128 : vector<32x128xi1>, vector<32x128xi32>
    %c0_42 = arith.constant 0 : index
    %c0_43 = arith.constant 0 : index
    %133 = vector.load %arg5[%c0_42, %c0_43] : memref<32x128xi32, #tpu.memory_space<vmem>>, vector<32x128xi32>
    tpu.vector_store %arg5[%c0_42, %c0_43], %132 {strides = array<i32>} : memref<32x128xi32, #tpu.memory_space<vmem>>, vector<32x128xi32>,
    %134 = vector.broadcast %123 : vector<32x1xi32> to vector<32x128xi32>
    %135 = arith.cmpi sle, %122, %134 : vector<32x128xi32>
    %136 = arith.extui %135 : vector<32x128xi1> to vector<32x128xi32>
    %c0_44 = arith.constant 0 : index
    %c0_45 = arith.constant 0 : index
    %137 = vector.load %arg6[%c0_44, %c0_45] : memref<32x128xi32, #tpu.memory_space<vmem>>, vector<32x128xi32>
    tpu.vector_store %arg6[%c0_44, %c0_45], %136 {strides = array<i32>} : memref<32x128xi32, #tpu.memory_space<vmem>>, vector<32x128xi32>,
    return
  }
  func.func @transform_0(%arg0: i32, %arg1: memref<32xi32, #tpu.memory_space<smem>>) -> (i32, i32) {
    %c0_i32 = arith.constant 0 : i32
    %c0_i32_0 = arith.constant 0 : i32
    return %arg0, %c0_i32 : i32, i32
  }
  func.func @transform_1(%arg0: i32, %arg1: memref<32xi32, #tpu.memory_space<smem>>) -> (i32, i32) {
    %c0_i32 = arith.constant 0 : i32
    %c0_i32_0 = arith.constant 0 : i32
    %c0_i32_1 = arith.constant 0 : i32
    return %c0_i32, %c0_i32_0 : i32, i32
  }
  func.func @transform_2(%arg0: i32, %arg1: memref<32xi32, #tpu.memory_space<smem>>) -> (i32, i32) {
    %c0_i32 = arith.constant 0 : i32
    %c0_i32_0 = arith.constant 0 : i32
    return %arg0, %c0_i32 : i32, i32
  }
  func.func @transform_3(%arg0: i32, %arg1: memref<32xi32, #tpu.memory_space<smem>>) -> (i32, i32) {
    %c0_i32 = arith.constant 0 : i32
    %c0_i32_0 = arith.constant 0 : i32
    return %arg0, %c0_i32 : i32, i32
  }
  func.func @transform_4(%arg0: i32, %arg1: memref<32xi32, #tpu.memory_space<smem>>) -> (i32, i32) {
    %c0_i32 = arith.constant 0 : i32
    %c0_i32_0 = arith.constant 0 : i32
    return %arg0, %c0_i32 : i32, i32
  }
}

</mosaic_0001>

<llo_original>
// kernel: tpu_custom_call.1
$region0: #{tpu_custom_call.1}
  #allocation0 [shape = 'u32[]', space=smem, size = 0x4, offset = 0x4, fixed_abs, tag = 'smem constant byte address 0x4 - core index']
  #allocation1 [shape = 'u32[144,128]{1,0:T(1,128)}', space=vmem, size = 0x12000, scoped, tag = 'internal scratch']
  #allocation2 [shape = 's32[32,128]{1,0:T(8,128)}', space=vmem, size = 0x4000, scoped, tag = 'scratch operand']
  #allocation3 [shape = 's32[1]{0}', space=sflag, size = 0x4, scoped, tag = 'scoped memory for tpu_custom_call.1']
  #allocation4 [shape = 'u8[512]{0}', space=smem, size = 0x200, scoped, tag = 'prefetched SMEM operand 0']
  %s0 = inlined_call_operand.vmem [shape: s32[32], index: 0, kind: input, shape index: {}]
  %s1 = inlined_call_operand.vmem [shape: s32[32,128], index: 1, kind: input, shape index: {}]
  %s2 = inlined_call_operand.vmem [shape: s32[4,128], index: 2, kind: input, shape index: {}]
  %s3 = inlined_call_operand.vmem [shape: s32[128,1], index: 3, kind: input, shape index: {}]
  %s4 = inlined_call_operand.hbm [shape: s32[128,128], index: 4, kind: output, shape index: {0}]
  %s5 = inlined_call_operand.hbm [shape: s32[128,128], index: 5, kind: output, shape index: {1}]
  %6 = xla_tuple %s4, %s5
  %s7 = sld [smem:[#allocation0]]
  $region53: #{tpu_custom_call.1} parent=0
    _
  %s9 = ssub.s32 1, %s7
  %s10 = scalar_select 0, %s9, %s7
  %s11 = sshll.u32 %s0, 4
  %s12 = int_to_ptr.vmem [resolvable:$true] %s11
  %14 = dma.vmem_to_smem %s12, 16, [#allocation4], [#allocation3]
  %15 = dma.done [#allocation3], 16
  %16 = sfence
  $region1: #{tpu_custom_call.1} parent=0
    #allocation5 [shape = 'u8[32768]{0}', space=vmem, size = 0x8000, scoped, tag = 'output window, operand 0']
    #allocation6 [shape = 's32[2]{0}', space=sflag, size = 0x8, scoped, tag = 'scoped memory for tpu_custom_call.1']
    #allocation7 [shape = 'u8[32768]{0}', space=vmem, size = 0x8000, scoped, tag = 'output window, operand 1']
    #allocation8 [shape = 's32[2]{0}', space=sflag, size = 0x8, scoped, tag = 'scoped memory for tpu_custom_call.1']
    %17 = vsyncpa [#allocation6], 0
    %s18 = scalar_lea.sflag [#allocation6], 1
    %19 = vsyncpa %s18, 0
    %20 = vsyncpa [#allocation8], 0
    %s21 = scalar_lea.sflag [#allocation8], 1
    %22 = vsyncpa %s21, 0
    loop: start=0, step=1, limit=6
    $region2: #{tpu_custom_call.1} parent=1 // loop_pre_header
      _
    $region3: #{tpu_custom_call.1} parent=1 // loop_header
      %s24 = sphi 0, %s28
      %p25 = scmp.ge.s32.totalorder %s24, 6
      %s34 = sphi 0, %s36
      %s37 = sphi 0, %s34
      %s38 = sphi 0, %s37
      %s54 = sphi 0, %s38
      %s58 = sphi 0, %s58
      %s60 = sphi 0, %s58
      %s61 = sphi 0, %s60
      %s75 = sphi 0, %s61
      %s81 = sphi 0, %s83
      %s84 = sphi 0, %s81
      %s85 = sphi 0, %s84
      %s101 = sphi 0, %s85
      %s107 = sphi 0, %s109
      %s110 = sphi 0, %s107
      %s111 = sphi 0, %s110
      %s127 = sphi 0, %s111
      %s133 = sphi 0, %s135
      %s136 = sphi 0, %s133
      %s137 = sphi 0, %s136
      %s153 = sphi 0, %s137
    $region4: #{tpu_custom_call.1} parent=1 // loop_header_branch
      %27 = sbr.rel (%p25) target = $region8
    $region5: #{tpu_custom_call.1} parent=1 // loop_body
      %s29 = ssub.s32 %s24, 1
      %s30 = ssub.s32 %s24, 2
      %s31 = sadd.s32 %s24, 1
      %s32 = ssub.s32 %s24, %s31
      %p33 = scmp.eq.s32.totalorder %s32, 0
      %s35 = sadd.s32 %s34, 1
      %s36 = scalar_select %p33, %s34, %s35
      %p39 = pneg %p33
      %p40 = scmp.eq.s32.totalorder %s24, 3
      %p41 = por %p39, %p40
      %p42 = scmp.ne.s32.totalorder %s34, %s37
      %p43 = scmp.eq.s32.totalorder %s24, 0
      %p44 = por %p42, %p43
      %p45 = scmp.ne.s32.totalorder %s34, %s37
      %p46 = scmp.eq.s32.totalorder %s29, 3
      %p47 = por %p45, %p46
      %p48 = scmp.ne.s32.totalorder %s37, %s38
      %p49 = scmp.eq.s32.totalorder %s29, 0
      %p50 = por %p48, %p49
      %p51 = scmp.ne.s32.totalorder %s37, %s38
      %p52 = scmp.eq.s32.totalorder %s30, 3
      %p53 = por %p51, %p52
      %p55 = scmp.ne.s32.totalorder %s38, %s54
      %p56 = scmp.eq.s32.totalorder %s30, 0
      %p57 = por %p55, %p56
      %s59 = sadd.s32 %s58, 1
      %p62 = scmp.eq.s32.totalorder %s24, 3
      %p63 = scmp.ne.s32.totalorder %s58, %s60
      %p64 = scmp.eq.s32.totalorder %s24, 0
      %p65 = por %p63, %p64
      %p66 = scmp.ne.s32.totalorder %s58, %s60
      %p67 = scmp.eq.s32.totalorder %s29, 3
      %p68 = por %p66, %p67
      %p69 = scmp.ne.s32.totalorder %s60, %s61
      %p70 = scmp.eq.s32.totalorder %s29, 0
      %p71 = por %p69, %p70
      %p72 = scmp.ne.s32.totalorder %s60, %s61
      %p73 = scmp.eq.s32.totalorder %s30, 3
      %p74 = por %p72, %p73
      %p76 = scmp.ne.s32.totalorder %s61, %s75
      %p77 = scmp.eq.s32.totalorder %s30, 0
      %p78 = por %p76, %p77
      %s79 = ssub.s32 %s24, %s31
      %p80 = scmp.eq.s32.totalorder %s79, 0
      %s82 = sadd.s32 %s81, 1
      %s83 = scalar_select %p80, %s81, %s82
      %p86 = pneg %p80
      %p87 = scmp.eq.s32.totalorder %s24, 3
      %p88 = por %p86, %p87
      %p89 = scmp.ne.s32.totalorder %s81, %s84
      %p90 = scmp.eq.s32.totalorder %s24, 0
      %p91 = por %p89, %p90
      %p92 = scmp.ne.s32.totalorder %s81, %s84
      %p93 = scmp.eq.s32.totalorder %s29, 3
      %p94 = por %p92, %p93
      %p95 = scmp.ne.s32.totalorder %s84, %s85
      %p96 = scmp.eq.s32.totalorder %s29, 0
      %p97 = por %p95, %p96
      %p98 = scmp.ne.s32.totalorder %s84, %s85
      %p99 = scmp.eq.s32.totalorder %s30, 3
      %p100 = por %p98, %p99
      %p102 = scmp.ne.s32.totalorder %s85, %s101
      %p103 = scmp.eq.s32.totalorder %s30, 0
      %p104 = por %p102, %p103
      %s105 = ssub.s32 %s24, %s31
      %p106 = scmp.eq.s32.totalorder %s105, 0
      %s108 = sadd.s32 %s107, 1
      %s109 = scalar_select %p106, %s107, %s108
      %p112 = pneg %p106
      %p113 = scmp.eq.s32.totalorder %s24, 3
      %p114 = por %p112, %p113
      %p115 = scmp.ne.s32.totalorder %s107, %s110
      %p116 = scmp.eq.s32.totalorder %s24, 0
      %p117 = por %p115, %p116
      %p118 = scmp.ne.s32.totalorder %s107, %s110
      %p119 = scmp.eq.s32.totalorder %s29, 3
      %p120 = por %p118, %p119
      %p121 = scmp.ne.s32.totalorder %s110, %s111
      %p122 = scmp.eq.s32.totalorder %s29, 0
      %p123 = por %p121, %p122
      %p124 = scmp.ne.s32.totalorder %s110, %s111
      %p125 = scmp.eq.s32.totalorder %s30, 3
      %p126 = por %p124, %p125
      %p128 = scmp.ne.s32.totalorder %s111, %s127
      %p129 = scmp.eq.s32.totalorder %s30, 0
      %p130 = por %p128, %p129
      %s131 = ssub.s32 %s24, %s31
      %p132 = scmp.eq.s32.totalorder %s131, 0
      %s134 = sadd.s32 %s133, 1
      %s135 = scalar_select %p132, %s133, %s134
      %p138 = pneg %p132
      %p139 = scmp.eq.s32.totalorder %s24, 3
      %p140 = por %p138, %p139
      %p141 = scmp.ne.s32.totalorder %s133, %s136
      %p142 = scmp.eq.s32.totalorder %s24, 0
      %p143 = por %p141, %p142
      %p144 = scmp.ne.s32.totalorder %s133, %s136
      %p145 = scmp.eq.s32.totalorder %s29, 3
      %p146 = por %p144, %p145
      %p147 = scmp.ne.s32.totalorder %s136, %s137
      %p148 = scmp.eq.s32.totalorder %s29, 0
      %p149 = por %p147, %p148
      %p150 = scmp.ne.s32.totalorder %s136, %s137
      %p151 = scmp.eq.s32.totalorder %s30, 3
      %p152 = por %p150, %p151
      %p154 = scmp.ne.s32.totalorder %s137, %s153
      %p155 = scmp.eq.s32.totalorder %s30, 0
      %p156 = por %p154, %p155
      %p157 = scmp.le.s32.totalorder 1, %s24
      %p158 = scmp.lt.s32.totalorder %s24, 5
      %p159 = pnand %p157, %p158
      %p160 = pneg %p159
      // Predicated region
      $region9: #{tpu_custom_call.1} parent=5 // pred_check
        _
      $region10: #{tpu_custom_call.1} parent=5 // pred_check_branch
        %162 = sbr.rel (%p159) target = $region12
      $region11: #{tpu_custom_call.1} parent=5 // pred_region
        %s163 = ssub.s32 %s24, 1
        // Predicated region
        $region13: #{tpu_custom_call.1} parent=11 // pred_check
          %p164 = pneg %p71
        $region14: #{tpu_custom_call.1} parent=11 // pred_check_branch
          %166 = sbr.rel (%p164) target = $region16
        $region15: #{tpu_custom_call.1} parent=11 // pred_region
          _
        $region16: #{tpu_custom_call.1} parent=11 // pred_fallthru
          _
      $region12: #{tpu_custom_call.1} parent=5 // pred_fallthru
        _
      %p167 = scmp.lt.s32.totalorder %s24, 4
      // Predicated region
      $region17: #{tpu_custom_call.1} parent=5 // pred_check
        %p168 = pneg %p167
      $region18: #{tpu_custom_call.1} parent=5 // pred_check_branch
        %170 = sbr.rel (%p168) target = $region20
      $region19: #{tpu_custom_call.1} parent=5 // pred_region
        // Predicated region
        $region21: #{tpu_custom_call.1} parent=19 // pred_check
          %p171 = pneg %p44
        $region22: #{tpu_custom_call.1} parent=19 // pred_check_branch
          %173 = sbr.rel (%p171) target = $region24
        $region23: #{tpu_custom_call.1} parent=19 // pred_region
          %p174 = scmp.lt.s32.totalorder %s24, 3
          %s175 = scalar_select %p174, %s24, 3
          %s176 = smul.addr %s175, 8
          %s177 = scalar_lea.vmem %s1, %s176
        $region24: #{tpu_custom_call.1} parent=19 // pred_fallthru
          _
        // Predicated region
        $region25: #{tpu_custom_call.1} parent=19 // pred_check
          %p178 = pneg %p91
        $region26: #{tpu_custom_call.1} parent=19 // pred_check_branch
          %180 = sbr.rel (%p178) target = $region28
        $region27: #{tpu_custom_call.1} parent=19 // pred_region
          %s181 = smul.u32 4, %s24
          %p182 = scmp.lt.s32.totalorder %s181, 15
          %s183 = scalar_select %p182, %s181, 15
          %s184 = smul.addr %s183, 8
          %s185 = scalar_lea.vmem %s3, %s184
          %s186 = smul.u32 4, %s24
        $region28: #{tpu_custom_call.1} parent=19 // pred_fallthru
          _
      $region20: #{tpu_custom_call.1} parent=5 // pred_fallthru
        _
      %p187 = scmp.le.s32.totalorder 1, %s24
      %p188 = scmp.lt.s32.totalorder %s24, 5
      %p189 = pnand %p187, %p188
      %p190 = pneg %p189
      // Predicated region
      $region29: #{tpu_custom_call.1} parent=5 // pred_check
        _
      $region30: #{tpu_custom_call.1} parent=5 // pred_check_branch
        %192 = sbr.rel (%p189) target = $region32
      $region31: #{tpu_custom_call.1} parent=5 // pred_region
        %s193 = ssub.s32 %s24, 1
        %p194 = scmp.lt.s32.totalorder %s29, 3
        %s195 = scalar_select %p194, %s29, 3
        %s196 = smul.addr %s195, 8
        %s197 = scalar_lea.vmem %s1, %s196
        %p198 = pneg %p50
        %p199 = pneg %p47
        %p200 = pneg %p71
        %p201 = pneg %p68
        %s202 = smul.u32 4, %s29
        %p203 = scmp.lt.s32.totalorder %s202, 15
        %s204 = scalar_select %p203, %s202, 15
        %s205 = smul.addr %s204, 8
        %s206 = scalar_lea.vmem %s3, %s205
        %p207 = pneg %p97
        %p208 = pneg %p94
        %p209 = pneg %p123
        %p210 = pneg %p120
        %s211 = sand.u32 %s110, 1
        %s212 = scalar_lea.sflag [#allocation6], %s211
        %s213 = sand.u32 %s110, 1
        %s214 = smul.addr %s213, 32
        %s215 = scalar_lea.vmem [#allocation5], %s214
        %p216 = pneg %p149
        %p217 = pneg %p146
        %s218 = sand.u32 %s136, 1
        %s219 = scalar_lea.sflag [#allocation8], %s218
        %s220 = sand.u32 %s136, 1
        %s221 = smul.addr %s220, 32
        %s222 = scalar_lea.vmem [#allocation7], %s221
        %p223 = scmp.lt.s32.totalorder %s29, 3
        %s224 = scalar_select %p223, %s29, 3
        %s225 = smul.addr %s224, 8
        %s226 = scalar_lea.vmem %s1, %s225
        %s227 = smul.u32 4, %s29
        %p228 = scmp.lt.s32.totalorder %s227, 15
        %s229 = scalar_select %p228, %s227, 15
        %s230 = smul.addr %s229, 8
        %s231 = scalar_lea.vmem %s3, %s230
        %s232 = smul.u32 4, %s29
        %s233 = smul.u32 4, %s29
        %s234 = smul.u32 4, %s29
        %v235 = vld [vmem:[%s2] sm:$0xf]
        %v236 = vlaneseq
        %v237 = vand.u32 %v236, 127
        %s238 = smul.u32 %s29, 8
        %s239 = sld [smem:[#allocation4 + %s238]]
        %s240 = sadd.s32 %s239, 1
        %s241 = sand.u32 %s240, 127
        %s242 = sand.u32 %s241, 127
        %243 = vrot.lane.b32.xlu0 %v235, %s242
        %v244 = vpop.permute.xlu0 %243
        %v245 = vld [vmem:[%s226] sm:$0x1]
        %v246 = vstv %s239
        %vm247 = vcmp.le.s32.totalorder %v237, %v246
        %v248 = vlaneseq
        %v249 = vshrl.u32 %v248, 7
        %v250 = vsub.s32 0, %v249
        %v251 = vrot.slane %v245, %v250
        %v252 = vsel %vm247, %v251, %v244
        %253 = vst [vmem:[#allocation2] sm:$0xf] %v252
        %s254 = sadd.s32 %s238, 1
        %s255 = sld [smem:[#allocation4 + %s254]]
        %s256 = sadd.s32 %s255, 1
        %s257 = sand.u32 %s256, 127
        %s258 = sand.u32 %s257, 127
        %259 = vrot.lane.b32.xlu0 %v235, %s258
        %v260 = vpop.permute.xlu0 %259
        %v261 = vld [vmem:[%s226 + $0x1] sm:$0x1]
        %v262 = vstv %s255
        %vm263 = vcmp.le.s32.totalorder %v237, %v262
        %v264 = vlaneseq
        %v265 = vshrl.u32 %v264, 7
        %v266 = vsub.s32 0, %v265
        %v267 = vrot.slane %v261, %v266
        %v268 = vsel %vm263, %v267, %v260
        %s269 = scalar_lea.vmem [#allocation2], 4
        %270 = vst [vmem:[%s269] sm:$0xf] %v268
        %s271 = sadd.s32 %s238, 2
        %s272 = sld [smem:[#allocation4 + %s271]]
        %s273 = sadd.s32 %s272, 1
        %s274 = sand.u32 %s273, 127
        %s275 = sand.u32 %s274, 127
        %276 = vrot.lane.b32.xlu0 %v235, %s275
        %v277 = vpop.permute.xlu0 %276
        %v278 = vld [vmem:[%s226 + $0x2] sm:$0x1]
        %v279 = vstv %s272
        %vm280 = vcmp.le.s32.totalorder %v237, %v279
        %v281 = vlaneseq
        %v282 = vshrl.u32 %v281, 7
        %v283 = vsub.s32 0, %v282
        %v284 = vrot.slane %v278, %v283
        %v285 = vsel %vm280, %v284, %v277
        %s286 = scalar_lea.vmem [#allocation2], 8
        %287 = vst [vmem:[%s286] sm:$0xf] %v285
        %s288 = sadd.s32 %s238, 3
        %s289 = sld [smem:[#allocation4 + %s288]]
        %s290 = sadd.s32 %s289, 1
        %s291 = sand.u32 %s290, 127
        %s292 = sand.u32 %s291, 127
        %293 = vrot.lane.b32.xlu0 %v235, %s292
        %v294 = vpop.permute.xlu0 %293
        %v295 = vld [vmem:[%s226 + $0x3] sm:$0x1]
        %v296 = vstv %s289
        %vm297 = vcmp.le.s32.totalorder %v237, %v296
        %v298 = vlaneseq
        %v299 = vshrl.u32 %v298, 7
        %v300 = vsub.s32 0, %v299
        %v301 = vrot.slane %v295, %v300
        %v302 = vsel %vm297, %v301, %v294
        %s303 = scalar_lea.vmem [#allocation2], 12
        %304 = vst [vmem:[%s303] sm:$0xf] %v302
        %s305 = sadd.s32 %s238, 4
        %s306 = sld [smem:[#allocation4 + %s305]]
        %s307 = sadd.s32 %s306, 1
        %s308 = sand.u32 %s307, 127
        %s309 = sand.u32 %s308, 127
        %310 = vrot.lane.b32.xlu0 %v235, %s309
        %v311 = vpop.permute.xlu0 %310
        %v312 = vld [vmem:[%s226 + $0x4] sm:$0x1]
        %v313 = vstv %s306
        %vm314 = vcmp.le.s32.totalorder %v237, %v313
        %v315 = vlaneseq
        %v316 = vshrl.u32 %v315, 7
        %v317 = vsub.s32 0, %v316
        %v318 = vrot.slane %v312, %v317
        %v319 = vsel %vm314, %v318, %v311
        %s320 = scalar_lea.vmem [#allocation2], 16
        %321 = vst [vmem:[%s320] sm:$0xf] %v319
        %s322 = sadd.s32 %s238, 5
        %s323 = sld [smem:[#allocation4 + %s322]]
        %s324 = sadd.s32 %s323, 1
        %s325 = sand.u32 %s324, 127
        %s326 = sand.u32 %s325, 127
        %327 = vrot.lane.b32.xlu0 %v235, %s326
        %v328 = vpop.permute.xlu0 %327
        %v329 = vld [vmem:[%s226 + $0x5] sm:$0x1]
        %v330 = vstv %s323
        %vm331 = vcmp.le.s32.totalorder %v237, %v330
        %v332 = vlaneseq
        %v333 = vshrl.u32 %v332, 7
        %v334 = vsub.s32 0, %v333
        %v335 = vrot.slane %v329, %v334
        %v336 = vsel %vm331, %v335, %v328
        %s337 = scalar_lea.vmem [#allocation2], 20
        %338 = vst [vmem:[%s337] sm:$0xf] %v336
        %s339 = sadd.s32 %s238, 6
        %s340 = sld [smem:[#allocation4 + %s339]]
        %s341 = sadd.s32 %s340, 1
        %s342 = sand.u32 %s341, 127
        %s343 = sand.u32 %s342, 127
        %344 = vrot.lane.b32.xlu0 %v235, %s343
        %v345 = vpop.permute.xlu0 %344
        %v346 = vld [vmem:[%s226 + $0x6] sm:$0x1]
        %v347 = vstv %s340
        %vm348 = vcmp.le.s32.totalorder %v237, %v347
        %v349 = vlaneseq
        %v350 = vshrl.u32 %v349, 7
        %v351 = vsub.s32 0, %v350
        %v352 = vrot.slane %v346, %v351
        %v353 = vsel %vm348, %v352, %v345
        %s354 = scalar_lea.vmem [#allocation2], 24
        %355 = vst [vmem:[%s354] sm:$0xf] %v353
        %s356 = sadd.s32 %s238, 7
        %s357 = sld [smem:[#allocation4 + %s356]]
        %s358 = sadd.s32 %s357, 1
        %s359 = sand.u32 %s358, 127
        %s360 = sand.u32 %s359, 127
        %361 = vrot.lane.b32.xlu0 %v235, %s360
        %v362 = vpop.permute.xlu0 %361
        %v363 = vld [vmem:[%s226 + $0x7] sm:$0x1]
        %v364 = vstv %s357
        %vm365 = vcmp.le.s32.totalorder %v237, %v364
        %v366 = vlaneseq
        %v367 = vshrl.u32 %v366, 7
        %v368 = vsub.s32 0, %v367
        %v369 = vrot.slane %v363, %v368
        %v370 = vsel %vm365, %v369, %v362
        %s371 = scalar_lea.vmem [#allocation2], 28
        %372 = vst [vmem:[%s371] sm:$0xf] %v370
        %v373 = vld [vmem:[%s231] sm:$0xff]
        %v374 = vld [vmem:[%s231 + $0x8] sm:$0xff]
        %v375 = vld [vmem:[%s231 + $0x10] sm:$0xff]
        %v376 = vld [vmem:[%s231 + $0x18] sm:$0xff]
        %v377 = vld [vmem:[#allocation2] sm:$0xff]
        %v378 = vld [vmem:[#allocation2 + $0x8] sm:$0xff]
        %v379 = vld [vmem:[#allocation2 + $0x10] sm:$0xff]
        %v380 = vld [vmem:[#allocation2 + $0x18] sm:$0xff]
        %381 = vset.pattern.permute.xlu0 0
        %382 = vperm.xlu0 %381, %v373
        %v383 = vpop.permute.xlu0 %382
        %384 = vset.pattern.permute.xlu0 0
        %385 = vperm.xlu0 %384, %v374
        %v386 = vpop.permute.xlu0 %385
        %387 = vset.pattern.permute.xlu0 0
        %388 = vperm.xlu0 %387, %v375
        %v389 = vpop.permute.xlu0 %388
        %390 = vset.pattern.permute.xlu0 0
        %391 = vperm.xlu0 %390, %v376
        %v392 = vpop.permute.xlu0 %391
        %vm393 = vcmp.lt.s32.totalorder %v237, %v383
        %vm394 = vcmp.lt.s32.totalorder %v237, %v386
        %vm395 = vcmp.lt.s32.totalorder %v237, %v389
        %vm396 = vcmp.lt.s32.totalorder %v237, %v392
        %v397 = vsel %vm393, %v377, 1
        %v398 = vsel %vm394, %v378, 1
        %v399 = vsel %vm395, %v379, 1
        %v400 = vsel %vm396, %v380, 1
        %vm401 = vcmp.eq.s32.totalorder %v237, %v383
        %vm402 = vcmp.eq.s32.totalorder %v237, %v386
        %vm403 = vcmp.eq.s32.totalorder %v237, %v389
        %vm404 = vcmp.eq.s32.totalorder %v237, %v392
        %v405 = vsel %vm401, 2, %v397
        %v406 = vsel %vm402, 2, %v398
        %v407 = vsel %vm403, 2, %v399
        %v408 = vsel %vm404, 2, %v400
        %409 = vst [vmem:[%s215] sm:$0xff] %v405
        %410 = vst [vmem:[%s215 + $0x8] sm:$0xff] %v406
        %411 = vst [vmem:[%s215 + $0x10] sm:$0xff] %v407
        %412 = vst [vmem:[%s215 + $0x18] sm:$0xff] %v408
        %vm413 = vcmp.le.s32.totalorder %v237, %v383
        %vm414 = vcmp.le.s32.totalorder %v237, %v386
        %vm415 = vcmp.le.s32.totalorder %v237, %v389
        %vm416 = vcmp.le.s32.totalorder %v237, %v392
        %v417 = vsel %vm413, 1, 0
        %v418 = vsel %vm414, 1, 0
        %v419 = vsel %vm415, 1, 0
        %v420 = vsel %vm416, 1, 0
        %421 = vst [vmem:[%s222] sm:$0xff] %v417
        %422 = vst [vmem:[%s222 + $0x8] sm:$0xff] %v418
        %423 = vst [vmem:[%s222 + $0x10] sm:$0xff] %v419
        %424 = vst [vmem:[%s222 + $0x18] sm:$0xff] %v420
        %s425 = sand.u32 %s110, 1
        %s426 = scalar_lea.sflag [#allocation6], %s425
        %s427 = sand.u32 %s110, 1
        %s428 = smul.addr %s427, 32
        %s429 = scalar_lea.vmem [#allocation5], %s428
        %s430 = sand.u32 %s136, 1
        %s431 = scalar_lea.sflag [#allocation8], %s430
        %s432 = sand.u32 %s136, 1
        %s433 = smul.addr %s432, 32
        %s434 = scalar_lea.vmem [#allocation7], %s433
        // Predicated region
        $region33: #{tpu_custom_call.1} parent=31 // pred_check
          %p435 = pneg %p120
        $region34: #{tpu_custom_call.1} parent=31 // pred_check_branch
          %437 = sbr.rel (%p435) target = $region36
        $region35: #{tpu_custom_call.1} parent=31 // pred_region
          %s438 = smul.u32 4, %s29
          %s440 = ssub.s32 512, 512
          %441 = vsyncadd %s426, %s440
          %s442 = smul.addr %s438, 128
          %s443 = scalar_lea.hbm %s4, %s442
          %s444 = sshll.u32 %s429, 4
          %s445 = int_to_ptr.vmem [resolvable:$true] %s444
          %450 = dma.vmem_to_hbm [thread:$0]  %s445, 512, %s443, %s426, 128, 128, 8
        $region36: #{tpu_custom_call.1} parent=31 // pred_fallthru
          _
        // Predicated region
        $region37: #{tpu_custom_call.1} parent=31 // pred_check
          %p451 = pneg %p146
        $region38: #{tpu_custom_call.1} parent=31 // pred_check_branch
          %453 = sbr.rel (%p451) target = $region40
        $region39: #{tpu_custom_call.1} parent=31 // pred_region
          %s454 = smul.u32 4, %s29
          %s456 = ssub.s32 512, 512
          %457 = vsyncadd %s431, %s456
          %s458 = smul.addr %s454, 128
          %s459 = scalar_lea.hbm %s5, %s458
          %s460 = sshll.u32 %s434, 4
          %s461 = int_to_ptr.vmem [resolvable:$true] %s460
          %466 = dma.vmem_to_hbm [thread:$0]  %s461, 512, %s459, %s431, 128, 128, 8
        $region40: #{tpu_custom_call.1} parent=31 // pred_fallthru
          _
      $region32: #{tpu_custom_call.1} parent=5 // pred_fallthru
        _
      %p467 = scmp.le.s32.totalorder 2, %s24
      // Predicated region
      $region41: #{tpu_custom_call.1} parent=5 // pred_check
        %p468 = pneg %p467
      $region42: #{tpu_custom_call.1} parent=5 // pred_check_branch
        %470 = sbr.rel (%p468) target = $region44
      $region43: #{tpu_custom_call.1} parent=5 // pred_region
        %s471 = ssub.s32 %s24, 2
        // Predicated region
        $region45: #{tpu_custom_call.1} parent=43 // pred_check
          %p472 = pneg %p126
        $region46: #{tpu_custom_call.1} parent=43 // pred_check_branch
          %474 = sbr.rel (%p472) target = $region48
        $region47: #{tpu_custom_call.1} parent=43 // pred_region
          %s475 = sand.u32 %s111, 1
          %s476 = scalar_lea.sflag [#allocation6], %s475
          %s477 = sand.u32 %s111, 1
          %s478 = smul.addr %s477, 32
          %s479 = scalar_lea.vmem [#allocation5], %s478
          %480 = dma.done %s476, 512
        $region48: #{tpu_custom_call.1} parent=43 // pred_fallthru
          _
        // Predicated region
        $region49: #{tpu_custom_call.1} parent=43 // pred_check
          %p481 = pneg %p152
        $region50: #{tpu_custom_call.1} parent=43 // pred_check_branch
          %483 = sbr.rel (%p481) target = $region52
        $region51: #{tpu_custom_call.1} parent=43 // pred_region
          %s484 = sand.u32 %s137, 1
          %s485 = scalar_lea.sflag [#allocation8], %s484
          %s486 = sand.u32 %s137, 1
          %s487 = smul.addr %s486, 32
          %s488 = scalar_lea.vmem [#allocation7], %s487
          %489 = dma.done %s485, 512
        $region52: #{tpu_custom_call.1} parent=43 // pred_fallthru
          _
      $region44: #{tpu_custom_call.1} parent=5 // pred_fallthru
        _
    $region6: #{tpu_custom_call.1} parent=1 // loop_footer
      %s28 = sadd.s32 1, %s24
    $region7: #{tpu_custom_call.1} parent=1 // loop_footer_branch
      %23 = sbr.rel target = $region3
    $region8: #{tpu_custom_call.1} parent=1 // loop_exit
      _
    %490 = vsyncpa [#allocation6], 1
    %s491 = scalar_lea.sflag [#allocation6], 1
    %492 = vsyncpa %s491, 1
    %493 = vsyncpa [#allocation8], 1
    %s494 = scalar_lea.sflag [#allocation8], 1
    %495 = vsyncpa %s494, 1

</llo_original>
